<compile_context>
chip_gen: v7x
topology: tpu7x:2x2x1
jax: 0.10.0
libtpu: 0.0.40
codegen_flags: <defaults>
</compile_context>

<pallas_src>
import jax
import jax.numpy as jnp
from jax.experimental import pallas as pl
from jax.experimental.pallas import tpu as pltpu


# -----------------------------------------------------------------------------
# Small helpers
# -----------------------------------------------------------------------------
def _round_up(x, m):
    return ((x + m - 1) // m) * m


def _round_down(x, m):
    return max(m, (x // m) * m)


def _vmem_limit_bytes():
    """Generation-aware VMEM limit: ~48 MiB on v7x (64 MiB/TC), ~96 MiB on v5e/v6e."""
    cap = 64 * 1024 * 1024  # conservative default (v7x per-TC physical)
    try:
        cap = int(pltpu.get_tpu_info().vmem_capacity_bytes)
    except Exception:
        pass
    return max(32 * 1024 * 1024, min((cap * 3) // 4, 100 * 1024 * 1024))


def _pick_bm(batch, d_in, x_itemsize, vmem_limit, *, n_x_buffers=2, act_row_bytes=0):
    """Batch tile from the VMEM budget: bm ~ budget / (buffers * d_in * itemsize + act)."""
    budget = vmem_limit // 2                      # headroom: weights, out, internal scratch
    per_row = n_x_buffers * d_in * x_itemsize + act_row_bytes + 2 * 4  # + out dbl-buffer
    bm_cap = max(8, budget // max(per_row, 1))
    bm = min(bm_cap, _round_up(batch, 8), 8192)
    bm = _round_down(bm, 256) if bm >= 256 else _round_up(bm, 8)
    return int(bm)


def _buffered_spec(shape, index_map, *, buffers=None):
    """BlockSpec with optional N-deep pipelining; falls back cleanly if unsupported."""
    if buffers is not None and hasattr(pl, "Buffered"):
        try:
            return pl.BlockSpec(shape, index_map, pipeline_mode=pl.Buffered(buffers))
        except TypeError:
            pass
    return pl.BlockSpec(shape, index_map)


# -----------------------------------------------------------------------------
# Kernels
# -----------------------------------------------------------------------------
def _collapsed_kernel(x_ref, w_ref, b_ref, o_ref):
    # One (bm, d_in) @ (d_in, 1) matvec + scalar bias (SMEM) + sigmoid.
    # x may arrive as bf16 (halved DMA) — cast inside the kernel, accumulate f32.
    x = x_ref[...].astype(jnp.float32)
    y = jnp.dot(x, w_ref[...], preferred_element_type=jnp.float32)
    o_ref[...] = jax.nn.sigmoid(y + b_ref[0]).astype(o_ref.dtype)


def _layered_kernel(x_ref,
                    w1_ref, b1_ref,
                    w2_ref, b2_ref,
                    w3_ref, b3_ref,
                    w45_ref, b45_ref,
                    o_ref):
    cdt = w1_ref.dtype                      # compute dtype (bf16 by default)
    h = x_ref[...].astype(cdt)

    def linear(h, w_ref, b_ref):
        y = jnp.dot(h, w_ref[...], preferred_element_type=jnp.float32)
        return (y + b_ref[...]).astype(cdt)     # biases kept in f32

    h = linear(h, w1_ref, b1_ref)   # Linear(d_in, 1024); Dropout(0.2) -> identity (eval)
    h = linear(h, w2_ref, b2_ref)   # Linear(1024, 128);  Dropout(0.2) -> identity (eval)
    h = linear(h, w3_ref, b3_ref)   # Linear(128, 64);    Dropout(0.1) -> identity (eval)
    # Layers 4 & 5 fused offline: Linear(64,16) @ Linear(16,1) -> single (64,1).
    y = jnp.dot(h, w45_ref[...], preferred_element_type=jnp.float32) + b45_ref[...]
    o_ref[...] = jax.nn.sigmoid(y).astype(o_ref.dtype)


# -----------------------------------------------------------------------------
# One-time parameter preparation (hoisted out of the per-call path)
# -----------------------------------------------------------------------------
def fold_params(params):
    """Fold the whole affine chain into (W_eff (d_in,1), b_eff (1,)).  Exact in eval."""
    w_eff, b_eff = params[0]
    for (w, b) in params[1:]:
        b_eff = b_eff @ w + b
        w_eff = w_eff @ w
    return w_eff, b_eff.reshape(-1)


def prepare_layered_params(params, compute_dtype=jnp.bfloat16):
    """Casts weights once and fuses the trailing (64->16)->(16->1) layers."""
    (w1, b1), (w2, b2), (w3, b3), (w4, b4), (w5, b5) = params
    w45 = w4 @ w5                              # (64, 1)
    b45 = b4 @ w5 + b5                         # (1, 1)
    f32 = jnp.float32
    return [w1.astype(compute_dtype), b1.astype(f32),
            w2.astype(compute_dtype), b2.astype(f32),
            w3.astype(compute_dtype), b3.astype(f32),
            w45.astype(compute_dtype), b45.astype(f32)]


# -----------------------------------------------------------------------------
# Forward wrappers
# -----------------------------------------------------------------------------
def aesthetic_forward_collapsed(x, w_eff, b_eff, *, bm=None):
    """Collapsed eval-mode forward.  x: (B, d_in) f32/bf16 -> (B, 1) f32."""
    B, d_in = x.shape
    vmem_limit = _vmem_limit_bytes()
    if bm is None:
        bm = _pick_bm(B, d_in, jnp.dtype(x.dtype).itemsize, vmem_limit, n_x_buffers=3)
    bm = max(8, _round_up(bm, 8))
    B_pad = _round_up(B, bm)
    if B_pad != B:
        x = jnp.pad(x, ((0, B_pad - B), (0, 0)))     # ragged batch -> pad, slice out
    grid = (B_pad // bm,)

    x_spec = _buffered_spec((bm, d_in), lambda i: (i, 0),
                            buffers=3 if grid[0] >= 3 else None)
    w_spec = pl.BlockSpec(w_eff.shape, lambda i: (0, 0))          # VMEM-resident
    b_spec = pl.BlockSpec(memory_space=pltpu.MemorySpace.SMEM)    # scalar bias in SMEM
    out_spec = pl.BlockSpec((bm, 1), lambda i: (i, 0))

    out = pl.pallas_call(
        _collapsed_kernel,
        out_shape=jax.ShapeDtypeStruct((B_pad, 1), jnp.float32),
        grid_spec=pltpu.PrefetchScalarGridSpec(
            num_scalar_prefetch=0,
            grid=grid,
            in_specs=[x_spec, w_spec, b_spec],
            out_specs=out_spec,
        ),
        compiler_params=pltpu.CompilerParams(
            dimension_semantics=("parallel",),    # shards batch across v7x's 2 TCs
            vmem_limit_bytes=vmem_limit,
        ),
    )(x, w_eff, b_eff)
    return out[:B]


def aesthetic_forward_layered(x, flat_params, *, bm=None):
    """Layered forward (structure preserved).  flat_params from prepare_layered_params."""
    B, d_in = x.shape
    vmem_limit = _vmem_limit_bytes()
    cdt_size = jnp.dtype(flat_params[0].dtype).itemsize
    # Budget the (bm, 1024) f32 accumulator + its compute-dtype copy per row.
    act_row_bytes = 1024 * (4 + cdt_size)
    if bm is None:
        bm = _pick_bm(B, d_in, jnp.dtype(x.dtype).itemsize, vmem_limit,
                      n_x_buffers=2, act_row_bytes=act_row_bytes)
    bm = max(8, _round_up(bm, 8))
    B_pad = _round_up(B, bm)
    if B_pad != B:
        x = jnp.pad(x, ((0, B_pad - B), (0, 0)))
    grid = (B_pad // bm,)

    def const_spec(shape):
        return pl.BlockSpec(shape, lambda i: (0, 0))   # DMA'd once, VMEM-resident

    in_specs = [pl.BlockSpec((bm, d_in), lambda i: (i, 0))]
    in_specs += [const_spec(p.shape) for p in flat_params]
    out_spec = pl.BlockSpec((bm, 1), lambda i: (i, 0))

    out = pl.pallas_call(
        _layered_kernel,
        out_shape=jax.ShapeDtypeStruct((B_pad, 1), jnp.float32),
        grid_spec=pltpu.PrefetchScalarGridSpec(
            num_scalar_prefetch=0,
            grid=grid,
            in_specs=in_specs,
            out_specs=out_spec,
        ),
        compiler_params=pltpu.CompilerParams(
            dimension_semantics=("parallel",),
            vmem_limit_bytes=vmem_limit,
        ),
    )(x, *flat_params)
    return out[:B]


# -----------------------------------------------------------------------------
# Deterministic parameter init (mimics nn.Linear default U(-1/sqrt(fan_in), ...)).
# Weights stored as (in, out); PyTorch stores (out, in) — transpose when porting.
# -----------------------------------------------------------------------------
def init_params(key, input_size):
    dims = [input_size, 1024, 128, 64, 16, 1]
    params = []
    for i in range(len(dims) - 1):
        fan_in, fan_out = dims[i], dims[i + 1]
        key, kw, kb = jax.random.split(key, 3)
        bound = 1.0 / (fan_in ** 0.5)
        w = jax.random.uniform(kw, (fan_in, fan_out), jnp.float32, -bound, bound)
        b = jax.random.uniform(kb, (1, fan_out), jnp.float32, -bound, bound)
        params.append((w, b))
    return params


def reference_forward(x, params):
    h = x
    for (w, b) in params:
        h = h @ w + b          # Dropout layers are identity in eval mode
    return jax.nn.sigmoid(h)


if __name__ == "__main__":
    input_size = 32
    batch = 16

    key = jax.random.PRNGKey(0)
    key, kx = jax.random.split(key)
    x = jax.random.normal(kx, (batch, input_size), dtype=jnp.float32)
    params = init_params(key, input_size)
    ref = reference_forward(x, params)

    # One-time (hoisted) parameter preparation.
    w_eff, b_eff = fold_params(params)
    layered_bf16 = prepare_layered_params(params, jnp.bfloat16)
    layered_f32 = prepare_layered_params(params, jnp.float32)

    # 1) Collapsed inference path (exact affine fold + sigmoid).
    out_c = jax.block_until_ready(aesthetic_forward_collapsed(x, w_eff, b_eff))
    assert out_c.shape == (batch, 1)
    assert jnp.allclose(out_c, ref, atol=1e-4, rtol=1e-4), (
        f"collapsed: max abs err {jnp.max(jnp.abs(out_c - ref))}")

    # 2) Layered path, bf16 weights / f32 accumulation, fused 4&5.
    out_l = jax.block_until_ready(aesthetic_forward_layered(x, layered_bf16))
    assert out_l.shape == (batch, 1)
    assert jnp.allclose(out_l, ref, atol=3e-2, rtol=3e-2), (
        f"layered bf16: max abs err {jnp.max(jnp.abs(out_l - ref))}")

    # 3) Layered path in full f32 (tight structural check).
    out_l32 = jax.block_until_ready(aesthetic_forward_layered(x, layered_f32))
    assert jnp.allclose(out_l32, ref, atol=1e-4, rtol=1e-4), (
        f"layered f32: max abs err {jnp.max(jnp.abs(out_l32 - ref))}")

    # 4) Ragged / multi-tile batch: exercises grid>1, Buffered(3), padding, "parallel".
    d2, B2 = 256, 300
    x2 = jax.random.normal(jax.random.PRNGKey(1), (B2, d2), jnp.float32)
    params2 = init_params(jax.random.PRNGKey(2), d2)
    w_eff2, b_eff2 = fold_params(params2)
    ref2 = reference_forward(x2, params2)
    out_r = jax.block_until_ready(aesthetic_forward_collapsed(x2, w_eff2, b_eff2))
    assert out_r.shape == (B2, 1)
    assert jnp.allclose(out_r, ref2, atol=1e-4, rtol=1e-4), (
        f"ragged collapsed: max abs err {jnp.max(jnp.abs(out_r - ref2))}")

    # 5) bf16 input x (halves the HBM read that bounds the collapsed path).
    out_bf = jax.block_until_ready(
        aesthetic_forward_collapsed(x2.astype(jnp.bfloat16), w_eff2, b_eff2))
    assert jnp.allclose(out_bf, ref2, atol=3e-2, rtol=3e-2), (
        f"bf16 x collapsed: max abs err {jnp.max(jnp.abs(out_bf - ref2))}")

    print("KERNEL_OK")
</pallas_src>

<mosaic_0001>
module attributes {stable_mosaic.version = 11 : i64} {
  func.func @_collapsed_kernel(%arg0: i32, %arg1: memref<16x32xf32, #tpu.memory_space<vmem>>, %arg2: memref<32x1xf32, #tpu.memory_space<vmem>>, %arg3: memref<1xf32, #tpu.memory_space<smem>>, %arg4: memref<16x1xf32, #tpu.memory_space<vmem>>) attributes {dimension_semantics = [#tpu.dimension_semantics<parallel>], iteration_bounds = array<i64: 1>, scalar_prefetch = 0 : i64, scratch_operands = 0 : i64, tpu.core_type = #tpu.core_type<tc>, window_params = [{transform_indices = @transform_0, window_bounds = array<i64: 16, 32>}, {pipeline_mode = #tpu.pipeline_mode<synchronous>, transform_indices = @transform_1, window_bounds = array<i64: 32, 1>}, {transform_indices = @transform_2, window_bounds = array<i64: 1>}, {transform_indices = @transform_3, window_bounds = array<i64: 16, 1>}]} {
    %c0 = arith.constant 0 : index
    %c0_0 = arith.constant 0 : index
    %0 = vector.load %arg1[%c0, %c0_0] : memref<16x32xf32, #tpu.memory_space<vmem>>, vector<16x32xf32>
    %c0_1 = arith.constant 0 : index
    %c0_2 = arith.constant 0 : index
    %1 = vector.load %arg2[%c0_1, %c0_2] : memref<32x1xf32, #tpu.memory_space<vmem>>, vector<32x1xf32>
    %cst = arith.constant dense<0.000000e+00> : vector<16x1xf32>
    %2 = tpu.matmul %0, %1, %cst {dimension_numbers = #tpu.dot_dimension_numbers<[1], [0], [0], [1], [0, 0, 1, 1], [], []>} : vector<16x32xf32>, vector<32x1xf32>, vector<16x1xf32> -> vector<16x1xf32>
    %c0_3 = arith.constant 0 : index
    %3 = memref.load %arg3[%c0_3] : memref<1xf32, #tpu.memory_space<smem>>
    %4 = vector.broadcast %3 : f32 to vector<16x1xf32>
    %5 = arith.addf %2, %4 : vector<16x1xf32>
    %6 = arith.negf %5 : vector<16x1xf32>
    %7 = math.exp %6 : vector<16x1xf32>
    %cst_4 = arith.constant 1.000000e+00 : f32
    %8 = vector.broadcast %cst_4 : f32 to vector<16x1xf32>
    %9 = arith.addf %8, %7 : vector<16x1xf32>
    %10 = arith.divf %8, %9 : vector<16x1xf32>
    %c0_5 = arith.constant 0 : index
    %c0_6 = arith.constant 0 : index
    %11 = vector.load %arg4[%c0_5, %c0_6] : memref<16x1xf32, #tpu.memory_space<vmem>>, vector<16x1xf32>
    tpu.vector_store %arg4[%c0_5, %c0_6], %10 {strides = array<i32>} : memref<16x1xf32, #tpu.memory_space<vmem>>, vector<16x1xf32>,
    return
  }
  func.func @transform_0(%arg0: i32) -> (i32, i32) {
    %c0_i32 = arith.constant 0 : i32
    %c0_i32_0 = arith.constant 0 : i32
    return %arg0, %c0_i32 : i32, i32
  }
  func.func @transform_1(%arg0: i32) -> (i32, i32) {
    %c0_i32 = arith.constant 0 : i32
    %c0_i32_0 = arith.constant 0 : i32
    %c0_i32_1 = arith.constant 0 : i32
    return %c0_i32, %c0_i32_0 : i32, i32
  }
  func.func @transform_2(%arg0: i32) -> i32 {
    %c0_i32 = arith.constant 0 : i32
    %c0_i32_0 = arith.constant 0 : i32
    return %c0_i32 : i32
  }
  func.func @transform_3(%arg0: i32) -> (i32, i32) {
    %c0_i32 = arith.constant 0 : i32
    %c0_i32_0 = arith.constant 0 : i32
    return %arg0, %c0_i32 : i32, i32
  }
}

</mosaic_0001>

<llo_original>
// kernel: tpu_custom_call.1
$region0: #{tpu_custom_call.1}
  #allocation0 [shape = 'u32[]', space=smem, size = 0x4, offset = 0x4, fixed_abs, tag = 'smem constant byte address 0x4 - core index']
  #allocation1 [shape = 'u32[144,128]{1,0:T(1,128)}', space=vmem, size = 0x12000, scoped, tag = 'internal scratch']
  #allocation2 [shape = 'f32[1]{0:T(128)S(6)}', space=smem, size = 0x200, scoped, tag = 'scoped memory for tpu_custom_call.1']
  %s0 = inlined_call_operand.vmem [shape: f32[16,32], index: 0, kind: input, shape index: {}]
  %s1 = inlined_call_operand.vmem [shape: f32[32,1], index: 1, kind: input, shape index: {}]
  %s2 = inlined_call_operand.<no memory space> [shape: f32[1], index: 2, kind: input, shape index: {}]
  %s3 = inlined_call_operand.vmem [shape: f32[16,1], index: 3, kind: output, shape index: {}]
  %s4 = sld [smem:[#allocation0]]
  $region22: #{tpu_custom_call.1} parent=0
    _
  %s6 = ssub.s32 1, %s4
  %s7 = scalar_select 0, %s6, %s4
  %8 = sst [smem:[#allocation2]] %s2
  // Predicated region
  $region2: #{tpu_custom_call.1} parent=0 // pred_check
    _
  $region3: #{tpu_custom_call.1} parent=0 // pred_check_branch
    %10 = sbr.rel (0) target = $region5
  $region4: #{tpu_custom_call.1} parent=0 // pred_region
    _
  $region5: #{tpu_custom_call.1} parent=0 // pred_fallthru
    _
  // Predicated region
  $region6: #{tpu_custom_call.1} parent=0 // pred_check
    _
  $region7: #{tpu_custom_call.1} parent=0 // pred_check_branch
    %12 = sbr.rel (0) target = $region9
  $region8: #{tpu_custom_call.1} parent=0 // pred_region
    _
  $region9: #{tpu_custom_call.1} parent=0 // pred_fallthru
    _
  // Predicated region
  $region10: #{tpu_custom_call.1} parent=0 // pred_check
    _
  $region11: #{tpu_custom_call.1} parent=0 // pred_check_branch
    %14 = sbr.rel (0) target = $region13
  $region12: #{tpu_custom_call.1} parent=0 // pred_region
    _
  $region13: #{tpu_custom_call.1} parent=0 // pred_fallthru
    _
  %v15 = vld [vmem:[%s0] sm:$0xff]
  %v16 = vld [vmem:[%s0 + $0x8] sm:$0xff]
  %v17 = vld [vmem:[%s1] sm:$0xff]
  %v18 = vld [vmem:[%s1 + $0x8] sm:$0xff]
  %v19 = vld [vmem:[%s1 + $0x10] sm:$0xff]
  %v20 = vld [vmem:[%s1 + $0x18] sm:$0xff]
  %s21 = sld [smem:[#allocation2]]
  %v22 = vstv %s21
  %vm23 = vcmask 261120
  %v25 = vsel %vm23, %v15, 0
  %v28 = vsel %vm23, %v16, 0
  %30 = vmatprep.subr.mxu0 0.0
  %31 = vmatpush1.msra.mxu0 %v17
  %32 = vmatprep.subr.mxu0 0.0
  %33 = vmatpush1.msra.mxu0 %v18
  %34 = vmatprep.subr.mxu0 0.0
  %35 = vmatpush1.msra.mxu0 %v19
  %36 = vmatprep.subr.mxu0 0.0
  %37 = vmatpush1.msra.mxu0 %v20
  %38 = vmatprep.subr.mxu0 0.0
  %39 = vmatpush1.msra.mxu0 0.0
  %40 = vmatprep.subr.mxu0 0.0
  %41 = vmatpush1.msra.mxu0 0.0
  %42 = vmatprep.subr.mxu0 0.0
  %43 = vmatpush1.msra.mxu0 0.0
  %44 = vmatprep.subr.mxu0 0.0
  %45 = vmatpush1.msra.mxu0 0.0
  %46 = vmatprep.subr.mxu0 0.0
  %47 = vmatpush1.msra.mxu0 0.0
  %48 = vmatprep.subr.mxu0 0.0
  %49 = vmatpush1.msra.mxu0 0.0
  %50 = vmatprep.subr.mxu0 0.0
  %51 = vmatpush1.msra.mxu0 0.0
  %52 = vmatprep.subr.mxu0 0.0
  %53 = vmatpush1.msra.mxu0 0.0
  %54 = vmatprep.subr.mxu0 0.0
  %55 = vmatpush1.msra.mxu0 0.0
  %56 = vmatprep.subr.mxu0 0.0
  %57 = vmatpush1.msra.mxu0 0.0
  %58 = vmatprep.subr.mxu0 0.0
  %59 = vmatpush1.msra.mxu0 0.0
  %60 = vmatprep.subr.mxu0 0.0
  %61 = vmatpush1.msra.mxu0 0.0
  %62 = vmatprep.subr.mxu0 0.0
  %63 = vmatpush1.msra.mxu0 0.0
  %64 = vmatprep.subr.mxu0 0.0
  %65 = vmatpush1.msra.mxu0 0.0
  %66 = vmatprep.subr.mxu0 0.0
  %67 = vmatpush1.msra.mxu0 0.0
  %68 = vmatprep.subr.mxu0 0.0
  %69 = vmatpush1.msra.mxu0 0.0
  %70 = vmatprep.subr.mxu0 0.0
  %71 = vmatpush1.msra.mxu0 0.0
  %72 = vmatprep.subr.mxu0 0.0
  %73 = vmatpush1.msra.mxu0 0.0
  %74 = vmatprep.subr.mxu0 0.0
  %75 = vmatpush1.msra.mxu0 0.0
  %76 = vmatprep.subr.mxu0 0.0
  %77 = vmatpush1.msra.mxu0 0.0
  %78 = vmatprep.subr.mxu0 0.0
  %79 = vmatpush1.msra.mxu0 0.0
  %80 = vmatprep.subr.mxu0 0.0
  %81 = vmatpush1.msra.mxu0 0.0
  %82 = vmatprep.subr.mxu0 0.0
  %83 = vmatpush1.msra.mxu0 0.0
  %84 = vmatprep.subr.mxu0 0.0
  %85 = vmatpush1.msra.mxu0 0.0
  %86 = vmatprep.subr.mxu0 0.0
  %87 = vmatpush1.msra.mxu0 0.0
  %88 = vmatprep.subr.mxu0 0.0
  %89 = vmatpush1.msra.mxu0 0.0
  %90 = vmatprep.subr.mxu0 0.0
  %91 = vmatpush1.msra.mxu0 0.0
  %92 = vmatprep.subr.mxu0 0.0
  %93 = vmatpush1.msra.mxu0 0.0
  %94 = vmatprep.mubr.f32.mxu0 0.0
  %95 = vmatmul.mubr.f32.gmra.mrb[0].mxu0 %v25
  %v96 = vpop.f32.mrb[0].mxu0
  %v97 = vadd.f32 %v22, %v96
  %v98 = vpop.f32.mrb[0].mxu0
  %99 = vmatprep.mubr.f32.mxu0 0.0
  %100 = vmatmul.mubr.f32.gmra.mrb[0].mxu0 %v28
  %v101 = vpop.f32.mrb[0].mxu0
  %v102 = vadd.f32 %v22, %v101
  %v103 = vpop.f32.mrb[0].mxu0
  %104 = vdwg.mxu0
  %v105 = vxor.u32 %v97, 2147483648
  %v106 = vxor.u32 %v102, 2147483648
  %v107 = vmul.f32 %v105, 1.442695
  %v108 = vpow.pop %v107
  %v109 = vmul.f32 %v106, 1.442695
  %v110 = vpow.pop %v109
  %v111 = vadd.f32 %v108, 1.0
  %v112 = vadd.f32 %v110, 1.0
  %v113 = vrcp.pop %v111
  %v114 = vmul.f32 1.0, %v113
  %v115 = vrcp.pop %v112
  %v116 = vmul.f32 1.0, %v115
  %vm117 = vcmask 7168
  %118 = vst.msk [vmem:[%s3] sm:$0xff] %vm117, %v114
  %119 = vst.msk [vmem:[%s3 + $0x8] sm:$0xff] %vm117, %v116
  // Predicated region
  $region14: #{tpu_custom_call.1} parent=0 // pred_check
    _
  $region15: #{tpu_custom_call.1} parent=0 // pred_check_branch
    %121 = sbr.rel (0) target = $region17
  $region16: #{tpu_custom_call.1} parent=0 // pred_region
    _
  $region17: #{tpu_custom_call.1} parent=0 // pred_fallthru
    _
  // Predicated region
  $region18: #{tpu_custom_call.1} parent=0 // pred_check
    _
  $region19: #{tpu_custom_call.1} parent=0 // pred_check_branch
    %123 = sbr.rel (0) target = $region21
  $region20: #{tpu_custom_call.1} parent=0 // pred_region
    _
  $region21: #{tpu_custom_call.1} parent=0 // pred_fallthru
    _

</llo_original>
